<compile_context>
chip_gen: v7x
topology: tpu7x:2x2x1
jax: 0.10.0
libtpu: 0.0.40
codegen_flags: <defaults>
</compile_context>

<pallas_src>
import functools

import jax
import jax.numpy as jnp
from jax import lax
from jax.experimental import pallas as pl
from jax.experimental.pallas import tpu as pltpu

LANES = 128
SUBLANES = 8


def _device_defaults():
    """(block_rows, num_slices, vmem_limit_bytes) keyed off the TPU generation."""
    kind = ""
    try:
        kind = jax.devices()[0].device_kind.lower()
    except Exception:  # pragma: no cover - defensive, e.g. AOT on CPU
        pass
    if "v5 lite" in kind or "v5e" in kind or "v5lite" in kind:
        # v5e: single TC, lowest HBM BW; 2 MiB f32 blocks already amortize the
        # per-step overhead, keep VMEM pressure modest (physical is 128 MiB).
        return 4096, 1, 64 << 20
    if "v7" in kind or "7x" in kind:
        # v7x: 2 TCs share ~3.2 TB/s HBM, 64 MiB VMEM/TC -> big blocks and a
        # real "parallel" split across the two cores.
        return 16384, 2, 48 << 20
    # v6e (and other single-TC chips): 4 MiB f32 blocks, plenty of VMEM.
    return 8192, 1, 64 << 20


def _square_measure_partials_kernel(shift_ref, x_ref, sum_ref, sq_ref, *,
                                    block_rows, blocks_per_slice, total_rows,
                                    needs_mask):
    """Accumulate per-slice (8,128) partials of (x - shift) and (x - shift)^2."""
    c = pl.program_id(0)   # core-slice axis ("parallel")
    b = pl.program_id(1)   # block-within-slice axis ("arbitrary", reduction)

    @pl.when(b == 0)
    def _():
        sum_ref[...] = jnp.zeros_like(sum_ref)
        sq_ref[...] = jnp.zeros_like(sq_ref)

    shift = shift_ref[0]
    x = x_ref[...].astype(jnp.float32)

    def accumulate(y):
        # Reduce the block to one vreg-shaped (8,128) partial: pure VPU adds.
        yg = y.reshape(block_rows // SUBLANES, SUBLANES, LANES)
        sum_ref[0] += jnp.sum(yg, axis=0)
        sq_ref[0] += jnp.sum(yg * yg, axis=0)

    if not needs_mask:
        # Dense grid coverage: every block is full, no masking anywhere.
        accumulate(x - shift)
    else:
        # Only the trailing (ragged or clamped-overflow) blocks pay the
        # iota+compare+select; all interior blocks take the fast path.
        row0 = (c * blocks_per_slice + b) * block_rows
        is_tail = row0 + block_rows > total_rows

        @pl.when(jnp.logical_not(is_tail))
        def _():
            accumulate(x - shift)

        @pl.when(is_tail)
        def _():
            row_ids = row0 + lax.broadcasted_iota(jnp.int32, x.shape, 0)
            accumulate(jnp.where(row_ids < total_rows, x - shift, 0.0))


def square_measure(x, *, block_rows=None, num_slices=None,
                   min_kernel_elems=1 << 18, force_kernel=False):
    """f(X) = Var(X)/2 - E[X] with unbiased variance over all elements."""
    x_flat = jnp.ravel(x)                  # native dtype, no f32 upcast in HBM
    n_valid = x_flat.shape[0]

    # Tiny inputs: a one-step Pallas launch is dominated by launch/DMA setup;
    # plain XLA fuses this into surrounding ops and is strictly faster.
    if not force_kernel and n_valid < min_kernel_elems:
        xf = x_flat.astype(jnp.float32)
        return jnp.var(xf, ddof=1) * 0.5 - jnp.mean(xf)

    d_block_rows, d_slices, vmem_limit = _device_defaults()
    if block_rows is None:
        block_rows = d_block_rows
    if num_slices is None:
        num_slices = d_slices

    # Numerical stabilizer for the single-pass variance: Var(X) = Var(X - c).
    # A single data sample is a good-enough shift against catastrophic
    # cancellation when |mean| >> std.
    shift = x_flat[0].astype(jnp.float32)
    shift_arr = jnp.reshape(shift, (1,))

    # Pad only up to one dtype-native packed tile so the flat vector reshapes
    # to a lane-dense (rows, 128) slab whose row count is tile-aligned
    # (8 rows f32, 16 rows bf16, 32 rows int8/fp8).  No copy when already
    # aligned (the common NN case).
    packing = max(1, 4 // x_flat.dtype.itemsize)
    tile_rows = SUBLANES * packing
    tile_elems = tile_rows * LANES
    pad = (-n_valid) % tile_elems
    if pad:
        x_flat = jnp.pad(x_flat, (0, pad))
    rows = x_flat.shape[0] // LANES
    x2d = x_flat.reshape(rows, LANES)

    # Clamp / align the block size to the dtype-native tile.
    block_rows = min(block_rows, rows)
    block_rows = max(tile_rows, (block_rows // tile_rows) * tile_rows)

    blocks_total = pl.cdiv(rows, block_rows)
    num_slices = max(1, min(num_slices, blocks_total))
    blocks_per_slice = pl.cdiv(blocks_total, num_slices)
    # Mask only when the (slice, block) grid over-covers `rows`; even then the
    # kernel only masks the trailing block(s).
    needs_mask = (num_slices * blocks_per_slice * block_rows) != rows

    def x_index_map(c, b):
        g = c * blocks_per_slice + b
        # Clamp fully out-of-range trailing blocks onto the last valid block;
        # their contribution is zeroed by the in-kernel tail mask.
        return (jnp.minimum(g, blocks_total - 1), 0)

    kernel = functools.partial(
        _square_measure_partials_kernel,
        block_rows=block_rows,
        blocks_per_slice=blocks_per_slice,
        total_rows=rows,
        needs_mask=needs_mask,
    )

    part_shape = jax.ShapeDtypeStruct((num_slices, SUBLANES, LANES),
                                      jnp.float32)
    cost = pl.CostEstimate(
        flops=4 * int(n_valid),
        transcendentals=0,
        bytes_accessed=int(x2d.size) * x2d.dtype.itemsize
        + 2 * num_slices * SUBLANES * LANES * 4 + 4,
    )

    sums, sumsqs = pl.pallas_call(
        kernel,
        out_shape=(part_shape, part_shape),
        grid_spec=pltpu.PrefetchScalarGridSpec(
            num_scalar_prefetch=0,
            grid=(num_slices, blocks_per_slice),
            in_specs=[
                pl.BlockSpec(memory_space=pltpu.MemorySpace.SMEM),
                pl.BlockSpec((block_rows, LANES), x_index_map),
            ],
            out_specs=[
                pl.BlockSpec((1, SUBLANES, LANES), lambda c, b: (c, 0, 0)),
                pl.BlockSpec((1, SUBLANES, LANES), lambda c, b: (c, 0, 0)),
            ],
        ),
        compiler_params=pltpu.CompilerParams(
            dimension_semantics=("parallel", "arbitrary"),
            vmem_limit_bytes=vmem_limit),
        cost_estimate=cost,
    )(shift_arr, x2d)

    # Tiny epilogue: one cross-lane reduce over O(num_slices * 1024) partials
    # plus the scalar combine.
    s = jnp.sum(sums)        # sum of (x - shift) including `pad` zero elements
    ss = jnp.sum(sumsqs)
    if pad:
        # Each zero-padded element contributed (-shift) and shift^2 in the
        # shifted domain; remove that exactly.
        s = s + pad * shift
        ss = ss - pad * (shift * shift)
    n = jnp.float32(n_valid)
    mean = s / n + shift
    # Unbiased variance (ddof=1).  n == 1 gives a non-finite result, matching
    # torch.var()'s behavior for a single element.
    var = (ss - s * s / n) / (n - 1.0)
    return var * 0.5 - mean


if __name__ == "__main__":
    key = jax.random.PRNGKey(0)

    # 1) Small NCHW-like input (same as the module's arbitrary-tensor forward);
    #    force the Pallas kernel so it is actually exercised at this size.
    x = jax.random.normal(key, (2, 4, 16, 16), dtype=jnp.float32)
    ref = jnp.var(x.reshape(-1), ddof=1) / 2.0 - jnp.mean(x)
    result = jax.block_until_ready(square_measure(x, force_kernel=True))
    assert jnp.allclose(result, ref, atol=1e-5, rtol=1e-5), (result, ref)
    # Auto path (tiny-input shortcut) must agree too.
    result_auto = jax.block_until_ready(square_measure(x))
    assert jnp.allclose(result_auto, ref, atol=1e-5, rtol=1e-5), (result_auto, ref)

    # 2) Ragged size + multi-block + forced 2-slice path (exercises the clamped
    #    index_map and the per-block tail mask) with a tiny block override.
    x2 = jax.random.normal(jax.random.PRNGKey(1), (3, 1000), dtype=jnp.float32)
    ref2 = jnp.var(x2.reshape(-1), ddof=1) / 2.0 - jnp.mean(x2)
    r2 = jax.block_until_ready(
        square_measure(x2, block_rows=8, num_slices=2, force_kernel=True))
    assert jnp.allclose(r2, ref2, atol=5e-5, rtol=5e-5), (r2, ref2)

    # 3) Larger input with a big mean offset: default (auto) kernel path plus
    #    the shifted single-pass variance numerics.
    x3 = 1000.0 + jax.random.normal(jax.random.PRNGKey(2), (512, 1024),
                                    dtype=jnp.float32)
    xf3 = x3.reshape(-1)
    ref3 = jnp.var(xf3, ddof=1) / 2.0 - jnp.mean(xf3)
    r3 = jax.block_until_ready(square_measure(x3))
    assert jnp.allclose(r3, ref3, atol=2e-2, rtol=1e-4), (r3, ref3)

    # 4) bf16 input (exercises the 16x128 dtype-native tile path).
    x4 = jax.random.normal(jax.random.PRNGKey(3), (256, 512),
                           dtype=jnp.bfloat16)
    xf4 = x4.reshape(-1).astype(jnp.float32)
    ref4 = jnp.var(xf4, ddof=1) / 2.0 - jnp.mean(xf4)
    r4 = jax.block_until_ready(square_measure(x4, force_kernel=True))
    assert jnp.allclose(r4, ref4, atol=1e-3, rtol=1e-3), (r4, ref4)

    print("KERNEL_OK")
</pallas_src>

<mosaic_0001>
module attributes {stable_mosaic.version = 11 : i64} {
  func.func @_square_measure_partials_kernel(%arg0: i32, %arg1: i32, %arg2: memref<1xf32, #tpu.memory_space<smem>>, %arg3: memref<16x128xf32, #tpu.memory_space<vmem>>, %arg4: memref<1x8x128xf32, #tpu.memory_space<vmem>>, %arg5: memref<1x8x128xf32, #tpu.memory_space<vmem>>) attributes {dimension_semantics = [#tpu.dimension_semantics<parallel>, #tpu.dimension_semantics<arbitrary>], iteration_bounds = array<i64: 1, 1>, scalar_prefetch = 0 : i64, scratch_operands = 0 : i64, tpu.core_type = #tpu.core_type<tc>, window_params = [{transform_indices = @transform_0, window_bounds = array<i64: 1>}, {transform_indices = @transform_1, window_bounds = array<i64: 16, 128>}, {transform_indices = @transform_2, window_bounds = array<i64: 1, 8, 128>}, {transform_indices = @transform_3, window_bounds = array<i64: 1, 8, 128>}]} {
    %c0_i32 = arith.constant 0 : i32
    %0 = arith.cmpi eq, %arg1, %c0_i32 : i32
    %1 = arith.extui %0 : i1 to i32
    %c0_i32_0 = arith.constant 0 : i32
    %2 = arith.cmpi ne, %1, %c0_i32_0 : i32
    scf.if %2 {
      %cst_16 = arith.constant 0.000000e+00 : f32
      %23 = vector.broadcast %cst_16 : f32 to vector<1x8x128xf32>
      %c0_17 = arith.constant 0 : index
      %c0_18 = arith.constant 0 : index
      %c0_19 = arith.constant 0 : index
      %24 = vector.load %arg4[%c0_17, %c0_18, %c0_19] : memref<1x8x128xf32, #tpu.memory_space<vmem>>, vector<1x8x128xf32>
      tpu.vector_store %arg4[%c0_17, %c0_18, %c0_19], %23 {strides = array<i32>} : memref<1x8x128xf32, #tpu.memory_space<vmem>>, vector<1x8x128xf32>,
      %cst_20 = arith.constant 0.000000e+00 : f32
      %25 = vector.broadcast %cst_20 : f32 to vector<1x8x128xf32>
      %c0_21 = arith.constant 0 : index
      %c0_22 = arith.constant 0 : index
      %c0_23 = arith.constant 0 : index
      %26 = vector.load %arg5[%c0_21, %c0_22, %c0_23] : memref<1x8x128xf32, #tpu.memory_space<vmem>>, vector<1x8x128xf32>
      tpu.vector_store %arg5[%c0_21, %c0_22, %c0_23], %25 {strides = array<i32>} : memref<1x8x128xf32, #tpu.memory_space<vmem>>, vector<1x8x128xf32>,
    } else {
    }
    %c0 = arith.constant 0 : index
    %3 = memref.load %arg2[%c0] : memref<1xf32, #tpu.memory_space<smem>>
    %c0_1 = arith.constant 0 : index
    %c0_2 = arith.constant 0 : index
    %4 = vector.load %arg3[%c0_1, %c0_2] : memref<16x128xf32, #tpu.memory_space<vmem>>, vector<16x128xf32>
    %5 = vector.broadcast %3 : f32 to vector<16x128xf32>
    %6 = arith.subf %4, %5 : vector<16x128xf32>
    %7 = vector.shape_cast %6 : vector<16x128xf32> to vector<2x8x128xf32>
    %c0_3 = arith.constant 0 : index
    %c0_4 = arith.constant 0 : index
    %c0_5 = arith.constant 0 : index
    %8 = vector.load %arg4[%c0_3, %c0_4, %c0_5] : memref<1x8x128xf32, #tpu.memory_space<vmem>>, vector<1x8x128xf32>
    %9 = vector.shape_cast %8 : vector<1x8x128xf32> to vector<8x128xf32>
    %cst = arith.constant dense<0.000000e+00> : vector<8x128xf32>
    %10 = vector.multi_reduction <add>, %7, %cst [0] : vector<2x8x128xf32> to vector<8x128xf32>
    %11 = arith.addf %9, %10 : vector<8x128xf32>
    %c0_6 = arith.constant 0 : index
    %c0_7 = arith.constant 0 : index
    %c0_8 = arith.constant 0 : index
    %12 = vector.load %arg4[%c0_6, %c0_7, %c0_8] : memref<1x8x128xf32, #tpu.memory_space<vmem>>, vector<1x8x128xf32>
    %13 = vector.shape_cast %12 : vector<1x8x128xf32> to vector<8x128xf32>
    %14 = vector.shape_cast %11 : vector<8x128xf32> to vector<1x8x128xf32>
    tpu.vector_store %arg4[%c0_6, %c0_7, %c0_8], %14 {strides = array<i32>} : memref<1x8x128xf32, #tpu.memory_space<vmem>>, vector<1x8x128xf32>,
    %c0_9 = arith.constant 0 : index
    %c0_10 = arith.constant 0 : index
    %c0_11 = arith.constant 0 : index
    %15 = vector.load %arg5[%c0_9, %c0_10, %c0_11] : memref<1x8x128xf32, #tpu.memory_space<vmem>>, vector<1x8x128xf32>
    %16 = vector.shape_cast %15 : vector<1x8x128xf32> to vector<8x128xf32>
    %17 = arith.mulf %7, %7 : vector<2x8x128xf32>
    %cst_12 = arith.constant dense<0.000000e+00> : vector<8x128xf32>
    %18 = vector.multi_reduction <add>, %17, %cst_12 [0] : vector<2x8x128xf32> to vector<8x128xf32>
    %19 = arith.addf %16, %18 : vector<8x128xf32>
    %c0_13 = arith.constant 0 : index
    %c0_14 = arith.constant 0 : index
    %c0_15 = arith.constant 0 : index
    %20 = vector.load %arg5[%c0_13, %c0_14, %c0_15] : memref<1x8x128xf32, #tpu.memory_space<vmem>>, vector<1x8x128xf32>
    %21 = vector.shape_cast %20 : vector<1x8x128xf32> to vector<8x128xf32>
    %22 = vector.shape_cast %19 : vector<8x128xf32> to vector<1x8x128xf32>
    tpu.vector_store %arg5[%c0_13, %c0_14, %c0_15], %22 {strides = array<i32>} : memref<1x8x128xf32, #tpu.memory_space<vmem>>, vector<1x8x128xf32>,
    return
  }
  func.func @transform_0(%arg0: i32, %arg1: i32) -> i32 {
    %c0_i32 = arith.constant 0 : i32
    %c0_i32_0 = arith.constant 0 : i32
    return %c0_i32 : i32
  }
  func.func @transform_1(%arg0: i32, %arg1: i32) -> (i32, i32) {
    %c1_i32 = arith.constant 1 : i32
    %0 = arith.muli %arg0, %c1_i32 : i32
    %1 = arith.addi %0, %arg1 : i32
    %c0_i32 = arith.constant 0 : i32
    %2 = arith.minsi %1, %c0_i32 : i32
    %c0_i32_0 = arith.constant 0 : i32
    %c0_i32_1 = arith.constant 0 : i32
    return %2, %c0_i32_0 : i32, i32
  }
  func.func @transform_2(%arg0: i32, %arg1: i32) -> (i32, i32, i32) {
    %c0_i32 = arith.constant 0 : i32
    %c0_i32_0 = arith.constant 0 : i32
    %c0_i32_1 = arith.constant 0 : i32
    return %arg0, %c0_i32, %c0_i32_0 : i32, i32, i32
  }
  func.func @transform_3(%arg0: i32, %arg1: i32) -> (i32, i32, i32) {
    %c0_i32 = arith.constant 0 : i32
    %c0_i32_0 = arith.constant 0 : i32
    %c0_i32_1 = arith.constant 0 : i32
    return %arg0, %c0_i32, %c0_i32_0 : i32, i32, i32
  }
}

</mosaic_0001>

<llo_original>
// kernel: tpu_custom_call.1
$region0: #{tpu_custom_call.1}
  #allocation0 [shape = 'u32[]', space=smem, size = 0x4, offset = 0x4, fixed_abs, tag = 'smem constant byte address 0x4 - core index']
  #allocation1 [shape = 'u32[144,128]{1,0:T(1,128)}', space=vmem, size = 0x12000, scoped, tag = 'internal scratch']
  #allocation2 [shape = 'f32[1]{0:T(128)S(6)}', space=smem, size = 0x200, scoped, tag = 'scoped memory for tpu_custom_call.1']
  %s0 = inlined_call_operand.<no memory space> [shape: f32[1], index: 0, kind: input, shape index: {}]
  %s1 = inlined_call_operand.hbm [shape: f32[16,128], index: 1, kind: input, shape index: {}]
  %s2 = inlined_call_operand.hbm [shape: f32[1,8,128], index: 2, kind: output, shape index: {0}]
  %s3 = inlined_call_operand.hbm [shape: f32[1,8,128], index: 3, kind: output, shape index: {1}]
  %4 = xla_tuple %s2, %s3
  %s5 = sld [smem:[#allocation0]]
  $region34: #{tpu_custom_call.1} parent=0
    _
  %s7 = ssub.s32 1, %s5
  %s8 = scalar_select 0, %s7, %s5
  %9 = sst [smem:[#allocation2]] %s0
  $region1: #{tpu_custom_call.1} parent=0
    #allocation3 [shape = 'u8[8192]{0}', space=vmem, size = 0x2000, scoped, tag = 'input window, operand 1, single buffered']
    #allocation4 [shape = 's32[1]{0}', space=sflag, size = 0x4, scoped, tag = 'scoped memory for tpu_custom_call.1']
    #allocation5 [shape = 's32[1]{0}', space=sflag, size = 0x4, scoped, tag = 'scoped memory for tpu_custom_call.1']
    #allocation6 [shape = 'u8[4096]{0}', space=vmem, size = 0x1000, scoped, tag = 'output window, operand 0, single buffered']
    #allocation7 [shape = 'u8[4096]{0}', space=vmem, size = 0x1000, scoped, tag = 'output window, operand 1, single buffered']
    #allocation8 [shape = 's32[1]{0}', space=sflag, size = 0x4, scoped, tag = 'scoped memory for tpu_custom_call.1']
    %10 = vsyncpa [#allocation4], 0
    %11 = vsyncpa [#allocation5], 0
    %12 = vsyncpa [#allocation8], 0
    // Predicated region
    $region2: #{tpu_custom_call.1} parent=1 // pred_check
      _
    $region3: #{tpu_custom_call.1} parent=1 // pred_check_branch
      %14 = sbr.rel (0) target = $region5
    $region4: #{tpu_custom_call.1} parent=1 // pred_region
      _
    $region5: #{tpu_custom_call.1} parent=1 // pred_fallthru
      _
    // Predicated region
    $region6: #{tpu_custom_call.1} parent=1 // pred_check
      _
    $region7: #{tpu_custom_call.1} parent=1 // pred_check_branch
      %16 = sbr.rel (0) target = $region9
    $region8: #{tpu_custom_call.1} parent=1 // pred_region
      %s17 = sadd.s32 0, 0
      %p18 = scmp.lt.s32.totalorder %s17, 0
      %s19 = scalar_select %p18, %s17, 0
      %s20 = smul.u32 2, %s19
      %s22 = ssub.s32 256, 256
      %23 = vsyncadd [#allocation4], %s22
      %s24 = smul.addr %s20, 128
      %s25 = scalar_lea.hbm %s1, %s24
      %s26 = sshll.u32 [#allocation3], 4
      %s27 = int_to_ptr.vmem [resolvable:$true] %s26
      %32 = dma.hbm_to_vmem [thread:$0]  %s25, 256, %s27, [#allocation4], 128, 128, 8
    $region9: #{tpu_custom_call.1} parent=1 // pred_fallthru
      _
    // Predicated region
    $region10: #{tpu_custom_call.1} parent=1 // pred_check
      _
    $region11: #{tpu_custom_call.1} parent=1 // pred_check_branch
      %34 = sbr.rel (0) target = $region13
    $region12: #{tpu_custom_call.1} parent=1 // pred_region
      %35 = dma.done [#allocation4], 256
    $region13: #{tpu_custom_call.1} parent=1 // pred_fallthru
      _
    %s36 = sadd.s32 0, 0
    %p37 = scmp.lt.s32.totalorder %s36, 0
    %s38 = scalar_select %p37, %s36, 0
    %s39 = smul.u32 2, %s38
    %p40 = scmp.eq.s32.totalorder 0, 0
    // Predicated region
    $region14: #{tpu_custom_call.1} parent=1 // pred_check
      %p41 = pneg %p40
    $region15: #{tpu_custom_call.1} parent=1 // pred_check_branch
      %43 = sbr.rel (%p41) target = $region17
    $region16: #{tpu_custom_call.1} parent=1 // pred_region
      %44 = vst [vmem:[#allocation6] sm:$0xff] 0.0
      %45 = vst [vmem:[#allocation7] sm:$0xff] 0.0
    $region17: #{tpu_custom_call.1} parent=1 // pred_fallthru
      _
    %s46 = sld [smem:[#allocation2]]
    %v47 = vld [vmem:[#allocation3] sm:$0xff]
    %v48 = vld [vmem:[#allocation3 + $0x8] sm:$0xff]
    %v49 = vstv %s46
    %v50 = vsub.f32 %v47, %v49
    %v51 = vsub.f32 %v48, %v49
    %v52 = vld [vmem:[#allocation6] sm:$0xff]
    %v53 = vadd.f32 %v50, %v51
    %v54 = vadd.f32 %v52, %v53
    %55 = vst [vmem:[#allocation6] sm:$0xff] %v54
    %v56 = vld [vmem:[#allocation7] sm:$0xff]
    %v57 = vmul.f32 %v50, %v50
    %v58 = vmul.f32 %v51, %v51
    %v59 = vadd.f32 %v57, %v58
    %v60 = vadd.f32 %v56, %v59
    %61 = vst [vmem:[#allocation7] sm:$0xff] %v60
    // Predicated region
    $region18: #{tpu_custom_call.1} parent=1 // pred_check
      _
    $region19: #{tpu_custom_call.1} parent=1 // pred_check_branch
      %63 = sbr.rel (0) target = $region21
    $region20: #{tpu_custom_call.1} parent=1 // pred_region
      %s65 = ssub.s32 128, 128
      %66 = vsyncadd [#allocation5], %s65
      %s68 = sshll.u32 [#allocation6], 4
      %s69 = int_to_ptr.vmem [resolvable:$true] %s68
      %71 = dma.vmem_to_hbm [thread:$0]  %s69, 128, %s2, [#allocation5]
    $region21: #{tpu_custom_call.1} parent=1 // pred_fallthru
      _
    // Predicated region
    $region22: #{tpu_custom_call.1} parent=1 // pred_check
      _
    $region23: #{tpu_custom_call.1} parent=1 // pred_check_branch
      %73 = sbr.rel (0) target = $region25
    $region24: #{tpu_custom_call.1} parent=1 // pred_region
      %s75 = ssub.s32 128, 128
      %76 = vsyncadd [#allocation8], %s75
      %s78 = sshll.u32 [#allocation7], 4
      %s79 = int_to_ptr.vmem [resolvable:$true] %s78
      %81 = dma.vmem_to_hbm [thread:$0]  %s79, 128, %s3, [#allocation8]
    $region25: #{tpu_custom_call.1} parent=1 // pred_fallthru
      _
    // Predicated region
    $region26: #{tpu_custom_call.1} parent=1 // pred_check
      _
    $region27: #{tpu_custom_call.1} parent=1 // pred_check_branch
      %83 = sbr.rel (0) target = $region29
    $region28: #{tpu_custom_call.1} parent=1 // pred_region
      %84 = dma.done [#allocation5], 128
    $region29: #{tpu_custom_call.1} parent=1 // pred_fallthru
      _
    // Predicated region
    $region30: #{tpu_custom_call.1} parent=1 // pred_check
      _
    $region31: #{tpu_custom_call.1} parent=1 // pred_check_branch
      %86 = sbr.rel (0) target = $region33
    $region32: #{tpu_custom_call.1} parent=1 // pred_region
      %87 = dma.done [#allocation8], 128
    $region33: #{tpu_custom_call.1} parent=1 // pred_fallthru
      _
    %88 = vsyncpa [#allocation4], 1
    %89 = vsyncpa [#allocation5], 1
    %90 = vsyncpa [#allocation8], 1

</llo_original>
